<compile_context>
chip_gen: v7x
topology: tpu7x:2x2x1
jax: 0.10.0
libtpu: 0.0.40
codegen_flags: <defaults>
</compile_context>

<pallas_src>
import math
import functools

import jax
import jax.numpy as jnp
from jax import lax
from jax.experimental import pallas as pl
from jax.experimental.pallas import tpu as pltpu


def _round_up(x, m):
    return ((x + m - 1) // m) * m


def _vmem_budget_bytes():
    """80% of this chip's VMEM capacity (conservative fallback: 64 MiB)."""
    try:
        cap = int(pltpu.get_tpu_info().vmem_capacity_bytes)
    except Exception:
        cap = 64 * 1024 * 1024
    return int(cap * 0.80)


def _vmem_estimate(tile_m, tile_v, H, bc, bo):
    """Bytes of VMEM for one grid step with double-buffered pipelined operands."""
    return (2 * tile_m * H * bc            # x row tile
            + 2 * H * H * bc               # dense W (conservatively x2)
            + 2 * 3 * H * 4                # dense bias / gamma / beta (f32)
            + 2 * H * tile_v * bc          # decoder W vocab tile
            + 2 * tile_v * 4               # decoder bias tile (f32)
            + 2 * tile_m * tile_v * bo     # output tile
            + tile_m * H * bc)             # h_scratch (compute dtype)


def _lm_head_kernel(x_ref, wd_ref, bd_ref, gamma_ref, beta_ref,
                    wdec_ref, bdec_ref, out_ref, h_scratch, *, eps):
    # Grid = (row tiles i, vocab tiles j); j is innermost and sequential.
    j = pl.program_id(1)

    @pl.when(j == 0)
    def _():
        # Dense projection (MXU, f32 accumulation) + bias.
        h = jnp.dot(x_ref[...], wd_ref[...],
                    preferred_element_type=jnp.float32)
        h = h + bd_ref[...]                          # (1, H) broadcast
        # Exact erf-based GELU (matches the PyTorch reference gelu()).
        h = h * 0.5 * (1.0 + lax.erf(h * (1.0 / math.sqrt(2.0))))
        # LayerNorm over the hidden axis (f32, biased variance as in BERT).
        mean = jnp.mean(h, axis=-1, keepdims=True)
        var = jnp.mean(jnp.square(h - mean), axis=-1, keepdims=True)
        h = (h - mean) * lax.rsqrt(var + eps)
        h = h * gamma_ref[...] + beta_ref[...]
        # Single cast to the MXU input dtype; reused for every vocab tile.
        h_scratch[...] = h.astype(h_scratch.dtype)

    # Decoder over the current vocab tile; accumulate in f32, add f32 bias.
    logits = jnp.dot(h_scratch[...], wdec_ref[...],
                     preferred_element_type=jnp.float32)
    out_ref[...] = (logits + bdec_ref[...]).astype(out_ref.dtype)


def prepare_lm_head_params(params, *, compute_dtype=jnp.bfloat16, tile_v=2048):
    """One-time (parameter-load-time) cast + vocab padding of the head weights.

    params["dense_w"] is (H, H) pre-transposed so the kernel does x @ W;
    params["decoder_w"] is (H, V) (tied embedding transposed).
    """
    H, V = params["decoder_w"].shape
    tile_v = max(128, min(_round_up(tile_v, 128), _round_up(V, 128)))
    V_pad = _round_up(V, tile_v)

    wdec = params["decoder_w"].astype(compute_dtype)                 # (H, V)
    bdec = params["decoder_b"].astype(jnp.float32).reshape(1, V)
    if V_pad != V:
        wdec = jnp.pad(wdec, ((0, 0), (0, V_pad - V)))
        bdec = jnp.pad(bdec, ((0, 0), (0, V_pad - V)))

    return {
        "dense_w": params["dense_w"].astype(compute_dtype),          # (H, H)
        "dense_b": params["dense_b"].astype(jnp.float32).reshape(1, H),
        "ln_gamma": params["ln_gamma"].astype(jnp.float32).reshape(1, H),
        "ln_beta": params["ln_beta"].astype(jnp.float32).reshape(1, H),
        "decoder_w": wdec,                                           # (H, V_pad)
        "decoder_b": bdec,                                           # (1, V_pad)
        "hidden": H,
        "vocab": V,
        "vocab_pad": V_pad,
        "tile_v": tile_v,
        "compute_dtype": compute_dtype,
    }


def bert_lm_prediction_head(sequence_output, prepared, *, eps=1e-12,
                            tile_m=1024, tile_v=None, out_dtype=None):
    """prediction_scores = decoder(LayerNorm(gelu(dense(x)))) + bias."""
    B, S, H = sequence_output.shape
    assert H == prepared["hidden"]
    M = B * S
    V = prepared["vocab"]
    V_pad = prepared["vocab_pad"]
    compute_dtype = prepared["compute_dtype"]
    out_dtype = out_dtype or compute_dtype

    # ---- tile selection -------------------------------------------------
    # Row tile: as large as possible (fewer decoder-weight re-streams), but
    # clamped to the problem size, and kept <= ceil(M/2) when M is large
    # enough so the "parallel" row axis can feed both v7x TensorCores.
    tile_m = min(tile_m, _round_up(M, 8))
    if M >= 512:
        tile_m = min(tile_m, _round_up(pl.cdiv(M, 2), 8))
    tile_m = max(tile_m, 8)

    # Vocab tile: starts from the padding quantum chosen at prepare time and
    # may only shrink by powers of two (divisibility of V_pad is preserved).
    tile_v = min(tile_v or prepared["tile_v"], prepared["tile_v"])
    tile_v = max(128, tile_v)
    while prepared["tile_v"] % tile_v != 0:   # keep V_pad % tile_v == 0
        tile_v //= 2

    bc = jnp.dtype(compute_dtype).itemsize
    bo = jnp.dtype(out_dtype).itemsize
    budget = _vmem_budget_bytes()
    # Auto-shrink tiles until the double-buffered working set fits the budget
    # (prefer shrinking tile_v first: it does not increase HBM traffic).
    while _vmem_estimate(tile_m, tile_v, H, bc, bo) > budget:
        if tile_v > 512:
            tile_v //= 2
        elif tile_m > 256:
            tile_m = max(8, _round_up(tile_m // 2, 8))
        elif tile_v > 128:
            tile_v //= 2
        elif tile_m > 8:
            tile_m = max(8, _round_up(tile_m // 2, 8))
        else:
            break

    M_pad = _round_up(M, tile_m)
    grid = (M_pad // tile_m, V_pad // tile_v)

    est = _vmem_estimate(tile_m, tile_v, H, bc, bo)
    vmem_limit = int(min(budget, max(est + (16 << 20), 32 << 20)))

    # ---- per-call operand prep (activations only; weights were prepared) --
    x2d = sequence_output.reshape(M, H).astype(compute_dtype)
    if M_pad != M:
        x2d = jnp.pad(x2d, ((0, M_pad - M), (0, 0)))

    wd = prepared["dense_w"]
    bd = prepared["dense_b"]
    gamma = prepared["ln_gamma"]
    beta = prepared["ln_beta"]
    wdec = prepared["decoder_w"]
    bdec = prepared["decoder_b"]

    kernel = functools.partial(_lm_head_kernel, eps=eps)

    def _run(single_buffer_consts):
        # Grid-invariant operands only need a single VMEM buffer.
        const_kw = ({"pipeline_mode": pl.Buffered(1)}
                    if single_buffer_consts else {})
        grid_spec = pltpu.PrefetchScalarGridSpec(
            num_scalar_prefetch=0,
            grid=grid,
            in_specs=[
                pl.BlockSpec((tile_m, H), lambda i, j: (i, 0)),            # x rows
                pl.BlockSpec((H, H), lambda i, j: (0, 0), **const_kw),     # dense W
                pl.BlockSpec((1, H), lambda i, j: (0, 0), **const_kw),     # dense b
                pl.BlockSpec((1, H), lambda i, j: (0, 0), **const_kw),     # ln gamma
                pl.BlockSpec((1, H), lambda i, j: (0, 0), **const_kw),     # ln beta
                pl.BlockSpec((H, tile_v), lambda i, j: (0, j)),            # decoder W
                pl.BlockSpec((1, tile_v), lambda i, j: (0, j)),            # decoder b
            ],
            out_specs=pl.BlockSpec((tile_m, tile_v), lambda i, j: (i, j)),
            scratch_shapes=[pltpu.VMEM((tile_m, H), compute_dtype)],
        )
        return pl.pallas_call(
            kernel,
            out_shape=jax.ShapeDtypeStruct((M_pad, V_pad), out_dtype),
            grid_spec=grid_spec,
            # Row axis parallel (megacore / dual-TC); vocab axis MUST stay
            # "arbitrary" (sequential, innermost) for h_scratch residency.
            compiler_params=pltpu.CompilerParams(
                dimension_semantics=("parallel", "arbitrary"),
                vmem_limit_bytes=vmem_limit),
        )(x2d, wd, bd, gamma, beta, wdec, bdec)

    try:
        out2d = _run(True)
    except Exception:
        # pl.Buffered(1) not accepted by this jax/Mosaic version -> fall back
        # to default double-buffering (identical numerics, slightly more VMEM).
        out2d = _run(False)

    return out2d[:M, :V].reshape(B, S, V)


def _reference(sequence_output, params, eps=1e-12):
    x = sequence_output.astype(jnp.float32)
    hp = lax.Precision.HIGHEST
    h = jnp.dot(x, params["dense_w"], precision=hp) + params["dense_b"]
    h = h * 0.5 * (1.0 + lax.erf(h / math.sqrt(2.0)))
    mean = h.mean(-1, keepdims=True)
    var = ((h - mean) ** 2).mean(-1, keepdims=True)
    h = (h - mean) / jnp.sqrt(var + eps)
    h = h * params["ln_gamma"] + params["ln_beta"]
    return jnp.dot(h, params["decoder_w"], precision=hp) + params["decoder_b"]


if __name__ == "__main__":
    key = jax.random.PRNGKey(0)
    k_x, k_wd, k_bd, k_emb, k_x2, k_x3 = jax.random.split(key, 6)

    def make_params(H, V):
        emb = jax.random.normal(k_emb, (V, H), jnp.float32) * 0.02
        return {
            # nn.Linear(H, H) weight is [H_out, H_in]; kernel computes x @ W,
            # so store the transpose.
            "dense_w": (jax.random.normal(k_wd, (H, H), jnp.float32) * 0.02).T,
            "dense_b": jax.random.normal(k_bd, (H,), jnp.float32) * 0.02,
            "ln_gamma": jnp.ones((H,), jnp.float32),     # BertLayerNorm defaults
            "ln_beta": jnp.zeros((H,), jnp.float32),
            "decoder_w": emb.T,                          # tied embedding, (H, V)
            "decoder_b": jnp.zeros((V,), jnp.float32),   # bias init to zeros
        }

    # Case 1: small tile-aligned shapes, f32 compute -> tight-ish tolerance.
    B, S, H, V = 2, 8, 128, 256
    params = make_params(H, V)
    prepared = prepare_lm_head_params(params, compute_dtype=jnp.float32)
    x = jax.random.normal(k_x, (B, S, H), dtype=jnp.float32)
    out = jax.block_until_ready(bert_lm_prediction_head(x, prepared))
    ref = _reference(x, params).reshape(B, S, V)
    assert out.shape == (B, S, V)
    assert jnp.allclose(out, ref, atol=2e-3, rtol=2e-3), "f32 mismatch vs reference"

    # Case 2: ragged M / V (exercises padding) + bf16 compute + bf16 logits.
    B2, S2, H2, V2 = 2, 7, 128, 250
    params2 = make_params(H2, V2)
    prepared2 = prepare_lm_head_params(params2, compute_dtype=jnp.bfloat16)
    x2 = jax.random.normal(k_x2, (B2, S2, H2), dtype=jnp.float32)
    out2 = jax.block_until_ready(bert_lm_prediction_head(x2, prepared2))
    ref2 = _reference(x2, params2).reshape(B2, S2, V2)
    assert out2.shape == (B2, S2, V2)
    assert out2.dtype == jnp.bfloat16
    assert jnp.allclose(out2.astype(jnp.float32), ref2, atol=8e-2, rtol=5e-2), \
        "bf16 mismatch vs reference (case 2)"

    # Case 3: medium M / V in bf16 -> exercises multiple row tiles (>=2 for the
    # parallel axis) and multiple vocab tiles (h_scratch reuse across j).
    B3, S3, H3, V3 = 2, 384, 256, 1024
    params3 = make_params(H3, V3)
    prepared3 = prepare_lm_head_params(params3, compute_dtype=jnp.bfloat16,
                                       tile_v=512)
    x3 = jax.random.normal(k_x3, (B3, S3, H3), dtype=jnp.float32)
    out3 = jax.block_until_ready(bert_lm_prediction_head(x3, prepared3))
    ref3 = _reference(x3, params3).reshape(B3, S3, V3)
    assert out3.shape == (B3, S3, V3)
    assert jnp.allclose(out3.astype(jnp.float32), ref3, atol=8e-2, rtol=5e-2), \
        "bf16 mismatch vs reference (case 3)"

    print("KERNEL_OK")
</pallas_src>

<mosaic_0001>
module attributes {stable_mosaic.version = 11 : i64} {
  func.func @_lm_head_kernel(%arg0: i32, %arg1: i32, %arg2: memref<16x128xf32, #tpu.memory_space<vmem>>, %arg3: memref<128x128xf32, #tpu.memory_space<vmem>>, %arg4: memref<1x128xf32, #tpu.memory_space<vmem>>, %arg5: memref<1x128xf32, #tpu.memory_space<vmem>>, %arg6: memref<1x128xf32, #tpu.memory_space<vmem>>, %arg7: memref<128x256xf32, #tpu.memory_space<vmem>>, %arg8: memref<1x256xf32, #tpu.memory_space<vmem>>, %arg9: memref<16x256xf32, #tpu.memory_space<vmem>>, %arg10: memref<16x128xf32, #tpu.memory_space<vmem>>) attributes {dimension_semantics = [#tpu.dimension_semantics<parallel>, #tpu.dimension_semantics<arbitrary>], iteration_bounds = array<i64: 1, 1>, scalar_prefetch = 0 : i64, scratch_operands = 1 : i64, tpu.core_type = #tpu.core_type<tc>, window_params = [{transform_indices = @transform_0, window_bounds = array<i64: 16, 128>}, {pipeline_mode = #tpu.pipeline_mode<synchronous>, transform_indices = @transform_1, window_bounds = array<i64: 128, 128>}, {pipeline_mode = #tpu.pipeline_mode<synchronous>, transform_indices = @transform_2, window_bounds = array<i64: 1, 128>}, {pipeline_mode = #tpu.pipeline_mode<synchronous>, transform_indices = @transform_3, window_bounds = array<i64: 1, 128>}, {pipeline_mode = #tpu.pipeline_mode<synchronous>, transform_indices = @transform_4, window_bounds = array<i64: 1, 128>}, {transform_indices = @transform_5, window_bounds = array<i64: 128, 256>}, {transform_indices = @transform_6, window_bounds = array<i64: 1, 256>}, {transform_indices = @transform_7, window_bounds = array<i64: 16, 256>}]} {
    %c0_i32 = arith.constant 0 : i32
    %0 = arith.cmpi eq, %arg1, %c0_i32 : i32
    %1 = arith.extui %0 : i1 to i32
    %c0_i32_0 = arith.constant 0 : i32
    %2 = arith.cmpi ne, %1, %c0_i32_0 : i32
    scf.if %2 {
      %c0_8 = arith.constant 0 : index
      %c0_9 = arith.constant 0 : index
      %10 = vector.load %arg2[%c0_8, %c0_9] : memref<16x128xf32, #tpu.memory_space<vmem>>, vector<16x128xf32>
      %c0_10 = arith.constant 0 : index
      %c0_11 = arith.constant 0 : index
      %11 = vector.load %arg3[%c0_10, %c0_11] : memref<128x128xf32, #tpu.memory_space<vmem>>, vector<128x128xf32>
      %cst_12 = arith.constant dense<0.000000e+00> : vector<16x128xf32>
      %12 = tpu.matmul %10, %11, %cst_12 {dimension_numbers = #tpu.dot_dimension_numbers<[1], [0], [0], [1], [0, 0, 1, 1], [], []>} : vector<16x128xf32>, vector<128x128xf32>, vector<16x128xf32> -> vector<16x128xf32>
      %c0_13 = arith.constant 0 : index
      %c0_14 = arith.constant 0 : index
      %13 = vector.load %arg4[%c0_13, %c0_14] : memref<1x128xf32, #tpu.memory_space<vmem>>, vector<1x128xf32>
      %14 = vector.broadcast %13 : vector<1x128xf32> to vector<16x128xf32>
      %15 = arith.addf %12, %14 : vector<16x128xf32>
      %cst_15 = arith.constant 5.000000e-01 : f32
      %16 = vector.broadcast %cst_15 : f32 to vector<16x128xf32>
      %17 = arith.mulf %15, %16 : vector<16x128xf32>
      %cst_16 = arith.constant 0.707106769 : f32
      %18 = vector.broadcast %cst_16 : f32 to vector<16x128xf32>
      %19 = arith.mulf %15, %18 : vector<16x128xf32>
      %20 = math.erf %19 : vector<16x128xf32>
      %cst_17 = arith.constant 1.000000e+00 : f32
      %21 = vector.broadcast %cst_17 : f32 to vector<16x128xf32>
      %22 = arith.addf %21, %20 : vector<16x128xf32>
      %23 = arith.mulf %17, %22 : vector<16x128xf32>
      %cst_18 = arith.constant dense<0.000000e+00> : vector<16xf32>
      %24 = vector.multi_reduction <add>, %23, %cst_18 [1] : vector<16x128xf32> to vector<16xf32>
      %25 = vector.shape_cast %24 : vector<16xf32> to vector<16x1xf32>
      %cst_19 = arith.constant 1.280000e+02 : f32
      %26 = vector.broadcast %cst_19 : f32 to vector<16x1xf32>
      %27 = arith.divf %25, %26 : vector<16x1xf32>
      %28 = vector.broadcast %27 : vector<16x1xf32> to vector<16x128xf32>
      %29 = arith.subf %23, %28 : vector<16x128xf32>
      %30 = arith.mulf %29, %29 : vector<16x128xf32>
      %cst_20 = arith.constant dense<0.000000e+00> : vector<16xf32>
      %31 = vector.multi_reduction <add>, %30, %cst_20 [1] : vector<16x128xf32> to vector<16xf32>
      %32 = vector.shape_cast %31 : vector<16xf32> to vector<16x1xf32>
      %cst_21 = arith.constant 1.280000e+02 : f32
      %33 = vector.broadcast %cst_21 : f32 to vector<16x1xf32>
      %34 = arith.divf %32, %33 : vector<16x1xf32>
      %35 = vector.broadcast %27 : vector<16x1xf32> to vector<16x128xf32>
      %36 = arith.subf %23, %35 : vector<16x128xf32>
      %cst_22 = arith.constant 9.99999996E-13 : f32
      %37 = vector.broadcast %cst_22 : f32 to vector<16x1xf32>
      %38 = arith.addf %34, %37 : vector<16x1xf32>
      %39 = math.rsqrt %38 : vector<16x1xf32>
      %40 = vector.broadcast %39 : vector<16x1xf32> to vector<16x128xf32>
      %41 = arith.mulf %36, %40 : vector<16x128xf32>
      %c0_23 = arith.constant 0 : index
      %c0_24 = arith.constant 0 : index
      %42 = vector.load %arg5[%c0_23, %c0_24] : memref<1x128xf32, #tpu.memory_space<vmem>>, vector<1x128xf32>
      %43 = vector.broadcast %42 : vector<1x128xf32> to vector<16x128xf32>
      %44 = arith.mulf %41, %43 : vector<16x128xf32>
      %c0_25 = arith.constant 0 : index
      %c0_26 = arith.constant 0 : index
      %45 = vector.load %arg6[%c0_25, %c0_26] : memref<1x128xf32, #tpu.memory_space<vmem>>, vector<1x128xf32>
      %46 = vector.broadcast %45 : vector<1x128xf32> to vector<16x128xf32>
      %47 = arith.addf %44, %46 : vector<16x128xf32>
      %c0_27 = arith.constant 0 : index
      %c0_28 = arith.constant 0 : index
      %48 = vector.load %arg10[%c0_27, %c0_28] : memref<16x128xf32, #tpu.memory_space<vmem>>, vector<16x128xf32>
      tpu.vector_store %arg10[%c0_27, %c0_28], %47 {strides = array<i32>} : memref<16x128xf32, #tpu.memory_space<vmem>>, vector<16x128xf32>,
    } else {
    }
    %c0 = arith.constant 0 : index
    %c0_1 = arith.constant 0 : index
    %3 = vector.load %arg10[%c0, %c0_1] : memref<16x128xf32, #tpu.memory_space<vmem>>, vector<16x128xf32>
    %c0_2 = arith.constant 0 : index
    %c0_3 = arith.constant 0 : index
    %4 = vector.load %arg7[%c0_2, %c0_3] : memref<128x256xf32, #tpu.memory_space<vmem>>, vector<128x256xf32>
    %cst = arith.constant dense<0.000000e+00> : vector<16x256xf32>
    %5 = tpu.matmul %3, %4, %cst {dimension_numbers = #tpu.dot_dimension_numbers<[1], [0], [0], [1], [0, 0, 1, 1], [], []>} : vector<16x128xf32>, vector<128x256xf32>, vector<16x256xf32> -> vector<16x256xf32>
    %c0_4 = arith.constant 0 : index
    %c0_5 = arith.constant 0 : index
    %6 = vector.load %arg8[%c0_4, %c0_5] : memref<1x256xf32, #tpu.memory_space<vmem>>, vector<1x256xf32>
    %7 = vector.broadcast %6 : vector<1x256xf32> to vector<16x256xf32>
    %8 = arith.addf %5, %7 : vector<16x256xf32>
    %c0_6 = arith.constant 0 : index
    %c0_7 = arith.constant 0 : index
    %9 = vector.load %arg9[%c0_6, %c0_7] : memref<16x256xf32, #tpu.memory_space<vmem>>, vector<16x256xf32>
    tpu.vector_store %arg9[%c0_6, %c0_7], %8 {strides = array<i32>} : memref<16x256xf32, #tpu.memory_space<vmem>>, vector<16x256xf32>,
    return
  }
  func.func @transform_0(%arg0: i32, %arg1: i32) -> (i32, i32) {
    %c0_i32 = arith.constant 0 : i32
    %c0_i32_0 = arith.constant 0 : i32
    return %arg0, %c0_i32 : i32, i32
  }
  func.func @transform_1(%arg0: i32, %arg1: i32) -> (i32, i32) {
    %c0_i32 = arith.constant 0 : i32
    %c0_i32_0 = arith.constant 0 : i32
    %c0_i32_1 = arith.constant 0 : i32
    return %c0_i32, %c0_i32_0 : i32, i32
  }
  func.func @transform_2(%arg0: i32, %arg1: i32) -> (i32, i32) {
    %c0_i32 = arith.constant 0 : i32
    %c0_i32_0 = arith.constant 0 : i32
    %c0_i32_1 = arith.constant 0 : i32
    return %c0_i32, %c0_i32_0 : i32, i32
  }
  func.func @transform_3(%arg0: i32, %arg1: i32) -> (i32, i32) {
    %c0_i32 = arith.constant 0 : i32
    %c0_i32_0 = arith.constant 0 : i32
    %c0_i32_1 = arith.constant 0 : i32
    return %c0_i32, %c0_i32_0 : i32, i32
  }
  func.func @transform_4(%arg0: i32, %arg1: i32) -> (i32, i32) {
    %c0_i32 = arith.constant 0 : i32
    %c0_i32_0 = arith.constant 0 : i32
    %c0_i32_1 = arith.constant 0 : i32
    return %c0_i32, %c0_i32_0 : i32, i32
  }
  func.func @transform_5(%arg0: i32, %arg1: i32) -> (i32, i32) {
    %c0_i32 = arith.constant 0 : i32
    %c0_i32_0 = arith.constant 0 : i32
    return %c0_i32, %arg1 : i32, i32
  }
  func.func @transform_6(%arg0: i32, %arg1: i32) -> (i32, i32) {
    %c0_i32 = arith.constant 0 : i32
    %c0_i32_0 = arith.constant 0 : i32
    return %c0_i32, %arg1 : i32, i32
  }
  func.func @transform_7(%arg0: i32, %arg1: i32) -> (i32, i32) {
    %c0_i32 = arith.constant 0 : i32
    return %arg0, %arg1 : i32, i32
  }
}

module attributes {stable_mosaic.version = 11 : i64} {
  func.func @_lm_head_kernel(%arg0: i32, %arg1: i32, %arg2: memref<16x128xf32, #tpu.memory_space<vmem>>, %arg3: memref<128x128xf32, #tpu.memory_space<vmem>>, %arg4: memref<1x128xf32, #tpu.memory_space<vmem>>, %arg5: memref<1x128xf32, #tpu.memory_space<vmem>>, %arg6: memref<1x128xf32, #tpu.memory_space<vmem>>, %arg7: memref<128x256xf32, #tpu.memory_space<vmem>>, %arg8: memref<1x256xf32, #tpu.memory_space<vmem>>, %arg9: memref<16x256xf32, #tpu.memory_space<vmem>>, %arg10: memref<16x128xf32, #tpu.memory_space<vmem>>) attributes {dimension_semantics = [#tpu.dimension_semantics<parallel>, #tpu.dimension_semantics<arbitrary>], iteration_bounds = array<i64: 1, 1>, scalar_prefetch = 0 : i64, scratch_operands = 1 : i64, tpu.core_type = #tpu.core_type<tc>, window_params = [{transform_indices = @transform_0, window_bounds = array<i64: 16, 128>}, {pipeline_mode = #tpu.pipeline_mode<synchronous>, transform_indices = @transform_1, window_bounds = array<i64: 128, 128>}, {pipeline_mode = #tpu.pipeline_mode<synchronous>, transform_indices = @transform_2, window_bounds = array<i64: 1, 128>}, {pipeline_mode = #tpu.pipeline_mode<synchronous>, transform_indices = @transform_3, window_bounds = array<i64: 1, 128>}, {pipeline_mode = #tpu.pipeline_mode<synchronous>, transform_indices = @transform_4, window_bounds = array<i64: 1, 128>}, {transform_indices = @transform_5, window_bounds = array<i64: 128, 256>}, {transform_indices = @transform_6, window_bounds = array<i64: 1, 256>}, {transform_indices = @transform_7, window_bounds = array<i64: 16, 256>}]} {
    %c0_i32 = arith.constant 0 : i32
    %0 = arith.cmpi eq, %arg1, %c0_i32 : i32
    %1 = arith.extui %0 : i1 to i32
    %c0_i32_0 = arith.constant 0 : i32
    %2 = arith.cmpi ne, %1, %c0_i32_0 : i32
    scf.if %2 {
      %c0_8 = arith.constant 0 : index
      %c0_9 = arith.constant 0 : index
      %10 = vector.load %arg2[%c0_8, %c0_9] : memref<16x128xf32, #tpu.memory_space<vmem>>, vector<16x128xf32>
      %c0_10 = arith.constant 0 : index
      %c0_11 = arith.constant 0 : index
      %11 = vector.load %arg3[%c0_10, %c0_11] : memref<128x128xf32, #tpu.memory_space<vmem>>, vector<128x128xf32>
      %cst_12 = arith.constant dense<0.000000e+00> : vector<16x128xf32>
      %12 = tpu.matmul %10, %11, %cst_12 {dimension_numbers = #tpu.dot_dimension_numbers<[1], [0], [0], [1], [0, 0, 1, 1], [], []>} : vector<16x128xf32>, vector<128x128xf32>, vector<16x128xf32> -> vector<16x128xf32>
      %c0_13 = arith.constant 0 : index
      %c0_14 = arith.constant 0 : index
      %13 = vector.load %arg4[%c0_13, %c0_14] : memref<1x128xf32, #tpu.memory_space<vmem>>, vector<1x128xf32>
      %14 = vector.broadcast %13 : vector<1x128xf32> to vector<16x128xf32>
      %15 = arith.addf %12, %14 : vector<16x128xf32>
      %cst_15 = arith.constant 5.000000e-01 : f32
      %16 = vector.broadcast %cst_15 : f32 to vector<16x128xf32>
      %17 = arith.mulf %15, %16 : vector<16x128xf32>
      %cst_16 = arith.constant 0.707106769 : f32
      %18 = vector.broadcast %cst_16 : f32 to vector<16x128xf32>
      %19 = arith.mulf %15, %18 : vector<16x128xf32>
      %20 = math.erf %19 : vector<16x128xf32>
      %cst_17 = arith.constant 1.000000e+00 : f32
      %21 = vector.broadcast %cst_17 : f32 to vector<16x128xf32>
      %22 = arith.addf %21, %20 : vector<16x128xf32>
      %23 = arith.mulf %17, %22 : vector<16x128xf32>
      %cst_18 = arith.constant dense<0.000000e+00> : vector<16xf32>
      %24 = vector.multi_reduction <add>, %23, %cst_18 [1] : vector<16x128xf32> to vector<16xf32>
      %25 = vector.shape_cast %24 : vector<16xf32> to vector<16x1xf32>
      %cst_19 = arith.constant 1.280000e+02 : f32
      %26 = vector.broadcast %cst_19 : f32 to vector<16x1xf32>
      %27 = arith.divf %25, %26 : vector<16x1xf32>
      %28 = vector.broadcast %27 : vector<16x1xf32> to vector<16x128xf32>
      %29 = arith.subf %23, %28 : vector<16x128xf32>
      %30 = arith.mulf %29, %29 : vector<16x128xf32>
      %cst_20 = arith.constant dense<0.000000e+00> : vector<16xf32>
      %31 = vector.multi_reduction <add>, %30, %cst_20 [1] : vector<16x128xf32> to vector<16xf32>
      %32 = vector.shape_cast %31 : vector<16xf32> to vector<16x1xf32>
      %cst_21 = arith.constant 1.280000e+02 : f32
      %33 = vector.broadcast %cst_21 : f32 to vector<16x1xf32>
      %34 = arith.divf %32, %33 : vector<16x1xf32>
      %35 = vector.broadcast %27 : vector<16x1xf32> to vector<16x128xf32>
      %36 = arith.subf %23, %35 : vector<16x128xf32>
      %cst_22 = arith.constant 9.99999996E-13 : f32
      %37 = vector.broadcast %cst_22 : f32 to vector<16x1xf32>
      %38 = arith.addf %34, %37 : vector<16x1xf32>
      %39 = math.rsqrt %38 : vector<16x1xf32>
      %40 = vector.broadcast %39 : vector<16x1xf32> to vector<16x128xf32>
      %41 = arith.mulf %36, %40 : vector<16x128xf32>
      %c0_23 = arith.constant 0 : index
      %c0_24 = arith.constant 0 : index
      %42 = vector.load %arg5[%c0_23, %c0_24] : memref<1x128xf32, #tpu.memory_space<vmem>>, vector<1x128xf32>
      %43 = vector.broadcast %42 : vector<1x128xf32> to vector<16x128xf32>
      %44 = arith.mulf %41, %43 : vector<16x128xf32>
      %c0_25 = arith.constant 0 : index
      %c0_26 = arith.constant 0 : index
      %45 = vector.load %arg6[%c0_25, %c0_26] : memref<1x128xf32, #tpu.memory_space<vmem>>, vector<1x128xf32>
      %46 = vector.broadcast %45 : vector<1x128xf32> to vector<16x128xf32>
      %47 = arith.addf %44, %46 : vector<16x128xf32>
      %c0_27 = arith.constant 0 : index
      %c0_28 = arith.constant 0 : index
      %48 = vector.load %arg10[%c0_27, %c0_28] : memref<16x128xf32, #tpu.memory_space<vmem>>, vector<16x128xf32>
      tpu.vector_store %arg10[%c0_27, %c0_28], %47 {strides = array<i32>} : memref<16x128xf32, #tpu.memory_space<vmem>>, vector<16x128xf32>,
    } else {
    }
    %c0 = arith.constant 0 : index
    %c0_1 = arith.constant 0 : index
    %3 = vector.load %arg10[%c0, %c0_1] : memref<16x128xf32, #tpu.memory_space<vmem>>, vector<16x128xf32>
    %c0_2 = arith.constant 0 : index
    %c0_3 = arith.constant 0 : index
    %4 = vector.load %arg7[%c0_2, %c0_3] : memref<128x256xf32, #tpu.memory_space<vmem>>, vector<128x256xf32>
    %cst = arith.constant dense<0.000000e+00> : vector<16x256xf32>
    %5 = tpu.matmul %3, %4, %cst {dimension_numbers = #tpu.dot_dimension_numbers<[1], [0], [0], [1], [0, 0, 1, 1], [], []>} : vector<16x128xf32>, vector<128x256xf32>, vector<16x256xf32> -> vector<16x256xf32>
    %c0_4 = arith.constant 0 : index
    %c0_5 = arith.constant 0 : index
    %6 = vector.load %arg8[%c0_4, %c0_5] : memref<1x256xf32, #tpu.memory_space<vmem>>, vector<1x256xf32>
    %7 = vector.broadcast %6 : vector<1x256xf32> to vector<16x256xf32>
    %8 = arith.addf %5, %7 : vector<16x256xf32>
    %c0_6 = arith.constant 0 : index
    %c0_7 = arith.constant 0 : index
    %9 = vector.load %arg9[%c0_6, %c0_7] : memref<16x256xf32, #tpu.memory_space<vmem>>, vector<16x256xf32>
    tpu.vector_store %arg9[%c0_6, %c0_7], %8 {strides = array<i32>} : memref<16x256xf32, #tpu.memory_space<vmem>>, vector<16x256xf32>,
    return
  }
  func.func @transform_0(%arg0: i32, %arg1: i32) -> (i32, i32) {
    %c0_i32 = arith.constant 0 : i32
    %c0_i32_0 = arith.constant 0 : i32
    return %arg0, %c0_i32 : i32, i32
  }
  func.func @transform_1(%arg0: i32, %arg1: i32) -> (i32, i32) {
    %c0_i32 = arith.constant 0 : i32
    %c0_i32_0 = arith.constant 0 : i32
    %c0_i32_1 = arith.constant 0 : i32
    return %c0_i32, %c0_i32_0 : i32, i32
  }
  func.func @transform_2(%arg0: i32, %arg1: i32) -> (i32, i32) {
    %c0_i32 = arith.constant 0 : i32
    %c0_i32_0 = arith.constant 0 : i32
    %c0_i32_1 = arith.constant 0 : i32
    return %c0_i32, %c0_i32_0 : i32, i32
  }
  func.func @transform_3(%arg0: i32, %arg1: i32) -> (i32, i32) {
    %c0_i32 = arith.constant 0 : i32
    %c0_i32_0 = arith.constant 0 : i32
    %c0_i32_1 = arith.constant 0 : i32
    return %c0_i32, %c0_i32_0 : i32, i32
  }
  func.func @transform_4(%arg0: i32, %arg1: i32) -> (i32, i32) {
    %c0_i32 = arith.constant 0 : i32
    %c0_i32_0 = arith.constant 0 : i32
    %c0_i32_1 = arith.constant 0 : i32
    return %c0_i32, %c0_i32_0 : i32, i32
  }
  func.func @transform_5(%arg0: i32, %arg1: i32) -> (i32, i32) {
    %c0_i32 = arith.constant 0 : i32
    %c0_i32_0 = arith.constant 0 : i32
    return %c0_i32, %arg1 : i32, i32
  }
  func.func @transform_6(%arg0: i32, %arg1: i32) -> (i32, i32) {
    %c0_i32 = arith.constant 0 : i32
    %c0_i32_0 = arith.constant 0 : i32
    return %c0_i32, %arg1 : i32, i32
  }
  func.func @transform_7(%arg0: i32, %arg1: i32) -> (i32, i32) {
    %c0_i32 = arith.constant 0 : i32
    return %arg0, %arg1 : i32, i32
  }
}

</mosaic_0001>

<llo_original>
// kernel: tpu_custom_call.1
$region0: #{tpu_custom_call.1}
  #allocation0 [shape = 'u32[]', space=smem, size = 0x4, offset = 0x4, fixed_abs, tag = 'smem constant byte address 0x4 - core index']
  #allocation1 [shape = 'u32[144,128]{1,0:T(1,128)}', space=vmem, size = 0x12000, scoped, tag = 'internal scratch']
  #allocation2 [shape = 'f32[16,128]{1,0:T(8,128)}', space=vmem, size = 0x2000, scoped, tag = 'scratch operand']
  %s0 = inlined_call_operand.hbm [shape: f32[16,128], index: 0, kind: input, shape index: {}]
  %s1 = inlined_call_operand.hbm [shape: f32[128,128], index: 1, kind: input, shape index: {}]
  %s2 = inlined_call_operand.vmem [shape: f32[1,128], index: 2, kind: input, shape index: {}]
  %s3 = inlined_call_operand.vmem [shape: f32[1,128], index: 3, kind: input, shape index: {}]
  %s4 = inlined_call_operand.vmem [shape: f32[1,128], index: 4, kind: input, shape index: {}]
  %s5 = inlined_call_operand.hbm [shape: f32[128,256], index: 5, kind: input, shape index: {}]
  %s6 = inlined_call_operand.vmem [shape: f32[1,256], index: 6, kind: input, shape index: {}]
  %s7 = inlined_call_operand.hbm [shape: f32[16,256], index: 7, kind: output, shape index: {}]
  %s8 = sld [smem:[#allocation0]]
  $region54: #{tpu_custom_call.1} parent=0
    _
  %s10 = ssub.s32 1, %s8
  %s11 = scalar_select 0, %s10, %s8
  $region1: #{tpu_custom_call.1} parent=0
    #allocation3 [shape = 'u8[8192]{0}', space=vmem, size = 0x2000, scoped, tag = 'input window, operand 0, single buffered']
    #allocation4 [shape = 's32[1]{0}', space=sflag, size = 0x4, scoped, tag = 'scoped memory for tpu_custom_call.1']
    #allocation5 [shape = 's32[1]{0}', space=sflag, size = 0x4, scoped, tag = 'scoped memory for tpu_custom_call.1']
    #allocation6 [shape = 'u8[65536]{0}', space=vmem, size = 0x10000, scoped, tag = 'input window, operand 1, single buffered']
    #allocation7 [shape = 's32[1]{0}', space=sflag, size = 0x4, scoped, tag = 'scoped memory for tpu_custom_call.1']
    #allocation8 [shape = 'u8[131072]{0}', space=vmem, size = 0x20000, scoped, tag = 'input window, operand 5, single buffered']
    #allocation9 [shape = 'u8[16384]{0}', space=vmem, size = 0x4000, scoped, tag = 'output window, operand 0, single buffered']
    %12 = vsyncpa [#allocation4], 0
    %13 = vsyncpa [#allocation7], 0
    %14 = vsyncpa [#allocation5], 0
    // Predicated region
    $region2: #{tpu_custom_call.1} parent=1 // pred_check
      _
    $region3: #{tpu_custom_call.1} parent=1 // pred_check_branch
      %16 = sbr.rel (0) target = $region5
    $region4: #{tpu_custom_call.1} parent=1 // pred_region
      %s18 = ssub.s32 256, 256
      %19 = vsyncadd [#allocation4], %s18
      %s20 = sshll.u32 [#allocation3], 4
      %s21 = int_to_ptr.vmem [resolvable:$true] %s20
      %26 = dma.hbm_to_vmem [thread:$0]  %s0, 256, %s21, [#allocation4], 128, 128, 8
    $region5: #{tpu_custom_call.1} parent=1 // pred_fallthru
      _
    // Predicated region
    $region6: #{tpu_custom_call.1} parent=1 // pred_check
      _
    $region7: #{tpu_custom_call.1} parent=1 // pred_check_branch
      %28 = sbr.rel (0) target = $region9
    $region8: #{tpu_custom_call.1} parent=1 // pred_region
      %s30 = ssub.s32 2048, 2048
      %31 = vsyncadd [#allocation7], %s30
      %s32 = sshll.u32 [#allocation6], 4
      %s33 = int_to_ptr.vmem [resolvable:$true] %s32
      %38 = dma.hbm_to_vmem [thread:$0]  %s1, 2048, %s33, [#allocation7], 128, 128, 8
    $region9: #{tpu_custom_call.1} parent=1 // pred_fallthru
      _
    // Predicated region
    $region10: #{tpu_custom_call.1} parent=1 // pred_check
      _
    $region11: #{tpu_custom_call.1} parent=1 // pred_check_branch
      %40 = sbr.rel (0) target = $region13
    $region12: #{tpu_custom_call.1} parent=1 // pred_region
      _
    $region13: #{tpu_custom_call.1} parent=1 // pred_fallthru
      _
    // Predicated region
    $region14: #{tpu_custom_call.1} parent=1 // pred_check
      _
    $region15: #{tpu_custom_call.1} parent=1 // pred_check_branch
      %42 = sbr.rel (0) target = $region17
    $region16: #{tpu_custom_call.1} parent=1 // pred_region
      _
    $region17: #{tpu_custom_call.1} parent=1 // pred_fallthru
      _
    // Predicated region
    $region18: #{tpu_custom_call.1} parent=1 // pred_check
      _
    $region19: #{tpu_custom_call.1} parent=1 // pred_check_branch
      %44 = sbr.rel (0) target = $region21
    $region20: #{tpu_custom_call.1} parent=1 // pred_region
      _
    $region21: #{tpu_custom_call.1} parent=1 // pred_fallthru
      _
    // Predicated region
    $region22: #{tpu_custom_call.1} parent=1 // pred_check
      _
    $region23: #{tpu_custom_call.1} parent=1 // pred_check_branch
      %46 = sbr.rel (0) target = $region25
    $region24: #{tpu_custom_call.1} parent=1 // pred_region
      %s48 = ssub.s32 4096, 4096
      %49 = vsyncadd [#allocation7], %s48
      %s50 = sshll.u32 [#allocation8], 4
      %s51 = int_to_ptr.vmem [resolvable:$true] %s50
      %56 = dma.hbm_to_vmem [thread:$0]  %s5, 4096, %s51, [#allocation7], 256, 256, 16
    $region25: #{tpu_custom_call.1} parent=1 // pred_fallthru
      _
    // Predicated region
    $region26: #{tpu_custom_call.1} parent=1 // pred_check
      _
    $region27: #{tpu_custom_call.1} parent=1 // pred_check_branch
      %58 = sbr.rel (0) target = $region29
    $region28: #{tpu_custom_call.1} parent=1 // pred_region
      _
    $region29: #{tpu_custom_call.1} parent=1 // pred_fallthru
      _
    // Predicated region
    $region30: #{tpu_custom_call.1} parent=1 // pred_check
      _
    $region31: #{tpu_custom_call.1} parent=1 // pred_check_branch
      %60 = sbr.rel (0) target = $region33
    $region32: #{tpu_custom_call.1} parent=1 // pred_region
      %61 = dma.done [#allocation4], 256
    $region33: #{tpu_custom_call.1} parent=1 // pred_fallthru
      _
    // Predicated region
    $region34: #{tpu_custom_call.1} parent=1 // pred_check
      _
    $region35: #{tpu_custom_call.1} parent=1 // pred_check_branch
      %63 = sbr.rel (0) target = $region37
    $region36: #{tpu_custom_call.1} parent=1 // pred_region
      %64 = dma.done [#allocation7], 2048
    $region37: #{tpu_custom_call.1} parent=1 // pred_fallthru
      _
    // Predicated region
    $region38: #{tpu_custom_call.1} parent=1 // pred_check
      _
    $region39: #{tpu_custom_call.1} parent=1 // pred_check_branch
      %66 = sbr.rel (0) target = $region41
    $region40: #{tpu_custom_call.1} parent=1 // pred_region
      %67 = dma.done [#allocation7], 4096
    $region41: #{tpu_custom_call.1} parent=1 // pred_fallthru
      _
    %p68 = scmp.eq.s32.totalorder 0, 0
    // Predicated region
    $region42: #{tpu_custom_call.1} parent=1 // pred_check
      %p69 = pneg %p68
    $region43: #{tpu_custom_call.1} parent=1 // pred_check_branch
      %71 = sbr.rel (%p69) target = $region45
    $region44: #{tpu_custom_call.1} parent=1 // pred_region
      %v72 = vld [vmem:[#allocation3] sm:$0xff]
      %v73 = vld [vmem:[#allocation3 + $0x8] sm:$0xff]
      %v74 = vld [vmem:[#allocation6] sm:$0xff]
      %v75 = vld [vmem:[#allocation6 + $0x8] sm:$0xff]
      %v76 = vld [vmem:[#allocation6 + $0x10] sm:$0xff]
      %v77 = vld [vmem:[#allocation6 + $0x18] sm:$0xff]
      %v78 = vld [vmem:[#allocation6 + $0x20] sm:$0xff]
      %v79 = vld [vmem:[#allocation6 + $0x28] sm:$0xff]
      %v80 = vld [vmem:[#allocation6 + $0x30] sm:$0xff]
      %v81 = vld [vmem:[#allocation6 + $0x38] sm:$0xff]
      %v82 = vld [vmem:[#allocation6 + $0x40] sm:$0xff]
      %v83 = vld [vmem:[#allocation6 + $0x48] sm:$0xff]
      %v84 = vld [vmem:[#allocation6 + $0x50] sm:$0xff]
      %v85 = vld [vmem:[#allocation6 + $0x58] sm:$0xff]
      %v86 = vld [vmem:[#allocation6 + $0x60] sm:$0xff]
      %v87 = vld [vmem:[#allocation6 + $0x68] sm:$0xff]
      %v88 = vld [vmem:[#allocation6 + $0x70] sm:$0xff]
      %v89 = vld [vmem:[#allocation6 + $0x78] sm:$0xff]
      %v90 = vld [vmem:[%s2] sm:$0x1]
      %v92 = vlaneseq
      %v93 = vshrl.u32 %v92, 7
      %v94 = vsub.s32 0, %v93
      %v95 = vrot.slane %v90, %v94
      %97 = vmatprep.subr.mxu0 0.0
      %98 = vmatpush1.msra.mxu0 %v74
      %99 = vmatprep.subr.mxu0 0.0
      %100 = vmatpush1.msra.mxu0 %v75
      %101 = vmatprep.subr.mxu0 0.0
      %102 = vmatpush1.msra.mxu0 %v76
      %103 = vmatprep.subr.mxu0 0.0
      %104 = vmatpush1.msra.mxu0 %v77
      %105 = vmatprep.subr.mxu0 0.0
      %106 = vmatpush1.msra.mxu0 %v78
      %107 = vmatprep.subr.mxu0 0.0
      %108 = vmatpush1.msra.mxu0 %v79
      %109 = vmatprep.subr.mxu0 0.0
      %110 = vmatpush1.msra.mxu0 %v80
      %111 = vmatprep.subr.mxu0 0.0
      %112 = vmatpush1.msra.mxu0 %v81
      %113 = vmatprep.subr.mxu0 0.0
      %114 = vmatpush1.msra.mxu0 %v82
      %115 = vmatprep.subr.mxu0 0.0
      %116 = vmatpush1.msra.mxu0 %v83
      %117 = vmatprep.subr.mxu0 0.0
      %118 = vmatpush1.msra.mxu0 %v84
      %119 = vmatprep.subr.mxu0 0.0
      %120 = vmatpush1.msra.mxu0 %v85
      %121 = vmatprep.subr.mxu0 0.0
      %122 = vmatpush1.msra.mxu0 %v86
      %123 = vmatprep.subr.mxu0 0.0
      %124 = vmatpush1.msra.mxu0 %v87
      %125 = vmatprep.subr.mxu0 0.0
      %126 = vmatpush1.msra.mxu0 %v88
      %127 = vmatprep.subr.mxu0 0.0
      %128 = vmatpush1.msra.mxu0 %v89
      %129 = vmatprep.subr.mxu0 0.0
      %130 = vmatpush1.msra.mxu0 0.0
      %131 = vmatprep.subr.mxu0 0.0
      %132 = vmatpush1.msra.mxu0 0.0
      %133 = vmatprep.subr.mxu0 0.0
      %134 = vmatpush1.msra.mxu0 0.0
      %135 = vmatprep.subr.mxu0 0.0
      %136 = vmatpush1.msra.mxu0 0.0
      %137 = vmatprep.subr.mxu0 0.0
      %138 = vmatpush1.msra.mxu0 0.0
      %139 = vmatprep.subr.mxu0 0.0
      %140 = vmatpush1.msra.mxu0 0.0
      %141 = vmatprep.subr.mxu0 0.0
      %142 = vmatpush1.msra.mxu0 0.0
      %143 = vmatprep.subr.mxu0 0.0
      %144 = vmatpush1.msra.mxu0 0.0
      %145 = vmatprep.subr.mxu0 0.0
      %146 = vmatpush1.msra.mxu0 0.0
      %147 = vmatprep.subr.mxu0 0.0
      %148 = vmatpush1.msra.mxu0 0.0
      %149 = vmatprep.subr.mxu0 0.0
      %150 = vmatpush1.msra.mxu0 0.0
      %151 = vmatprep.subr.mxu0 0.0
      %152 = vmatpush1.msra.mxu0 0.0
      %153 = vmatprep.subr.mxu0 0.0
      %154 = vmatpush1.msra.mxu0 0.0
      %155 = vmatprep.subr.mxu0 0.0
      %156 = vmatpush1.msra.mxu0 0.0
      %157 = vmatprep.subr.mxu0 0.0
      %158 = vmatpush1.msra.mxu0 0.0
      %159 = vmatprep.subr.mxu0 0.0
      %160 = vmatpush1.msra.mxu0 0.0
      %161 = vmatprep.mubr.f32.mxu0 0.0
      %162 = vmatmul.mubr.f32.gmra.mrb[0].mxu0 %v72
      %v163 = vpop.f32.mrb[0].mxu0
      %v164 = vadd.f32 %v95, %v163
      %v165 = vpop.f32.mrb[0].mxu0
      %166 = vmatprep.mubr.f32.mxu0 0.0
      %167 = vmatmul.mubr.f32.gmra.mrb[0].mxu0 %v73
      %v168 = vpop.f32.mrb[0].mxu0
      %v169 = vadd.f32 %v95, %v168
      %v170 = vpop.f32.mrb[0].mxu0
      %171 = vdwg.mxu0
      %v172 = vmul.f32 %v164, 0.5
      %v173 = vmul.f32 %v169, 0.5
      %v174 = vmul.f32 %v164, 0.70710677
      %v175 = vmul.f32 %v169, 0.70710677
      %v176 = verf.f32.pop %v174
      %v177 = verf.f32.pop %v175
      %v178 = vadd.f32 %v176, 1.0
      %v179 = vadd.f32 %v177, 1.0
      %v180 = vmul.f32 %v172, %v178
      %v181 = vmul.f32 %v173, %v179
      %182 = vadd.xlane.f32.xlu0 %v180
      %v183 = vpop.xlane.xlu0 %182
      %184 = vadd.xlane.f32.xlu0 %v181
      %v185 = vpop.xlane.xlu0 %184
      %v186 = vrcp.pop 128.0
      %v187 = vmul.f32 %v183, %v186
      %v188 = vmul.f32 %v185, %v186
      %v189 = vsub.f32 %v180, %v187
      %v190 = vsub.f32 %v181, %v188
      %v191 = vmul.f32 %v189, %v189
      %v192 = vmul.f32 %v190, %v190
      %193 = vadd.xlane.f32.xlu0 %v191
      %v194 = vpop.xlane.xlu0 %193
      %195 = vadd.xlane.f32.xlu0 %v192
      %v196 = vpop.xlane.xlu0 %195
      %v197 = vmul.f32 %v194, %v186
      %v198 = vmul.f32 %v196, %v186
      %v199 = vadd.f32 %v197, 1e-12
      %v200 = vadd.f32 %v198, 1e-12
      %v201 = vrsqrt.pop %v199
      %v202 = vrsqrt.pop %v200
      %v203 = vmul.f32 %v189, %v201
      %v204 = vmul.f32 %v190, %v202
      %v205 = vld [vmem:[%s3] sm:$0x1]
      %v207 = vlaneseq
      %v208 = vshrl.u32 %v207, 7
      %v209 = vsub.s32 0, %v208
      %v210 = vrot.slane %v205, %v209
      %v212 = vmul.f32 %v203, %v210
      %v213 = vmul.f32 %v204, %v210
      %v214 = vld [vmem:[%s4] sm:$0x1]
      %v216 = vlaneseq
      %v217 = vshrl.u32 %v216, 7
      %v218 = vsub.s32 0, %v217
      %v219 = vrot.slane %v214, %v218
      %v221 = vadd.f32 %v212, %v219
      %v222 = vadd.f32 %v213, %v219
      %223 = vst [vmem:[#allocation2] sm:$0xff] %v221
      %224 = vst [vmem:[#allocation2 + $0x8] sm:$0xff] %v222
    $region45: #{tpu_custom_call.1} parent=1 // pred_fallthru
      _
    %v225 = vld [vmem:[#allocation2] sm:$0xff]
    %v226 = vld [vmem:[#allocation2 + $0x8] sm:$0xff]
    %v227 = vld [vmem:[#allocation8] sm:$0xff]
    %v228 = vld [vmem:[#allocation8 + $0x8] sm:$0xff]
    %v229 = vld [vmem:[#allocation8 + $0x10] sm:$0xff]
    %v230 = vld [vmem:[#allocation8 + $0x18] sm:$0xff]
    %v231 = vld [vmem:[#allocation8 + $0x20] sm:$0xff]
    %v232 = vld [vmem:[#allocation8 + $0x28] sm:$0xff]
    %v233 = vld [vmem:[#allocation8 + $0x30] sm:$0xff]
    %v234 = vld [vmem:[#allocation8 + $0x38] sm:$0xff]
    %v235 = vld [vmem:[#allocation8 + $0x40] sm:$0xff]
    %v236 = vld [vmem:[#allocation8 + $0x48] sm:$0xff]
    %v237 = vld [vmem:[#allocation8 + $0x50] sm:$0xff]
    %v238 = vld [vmem:[#allocation8 + $0x58] sm:$0xff]
    %v239 = vld [vmem:[#allocation8 + $0x60] sm:$0xff]
    %v240 = vld [vmem:[#allocation8 + $0x68] sm:$0xff]
    %v241 = vld [vmem:[#allocation8 + $0x70] sm:$0xff]
    %v242 = vld [vmem:[#allocation8 + $0x78] sm:$0xff]
    %v243 = vld [vmem:[#allocation8 + $0x80] sm:$0xff]
    %v244 = vld [vmem:[#allocation8 + $0x88] sm:$0xff]
    %v245 = vld [vmem:[#allocation8 + $0x90] sm:$0xff]
    %v246 = vld [vmem:[#allocation8 + $0x98] sm:$0xff]
    %v247 = vld [vmem:[#allocation8 + $0xa0] sm:$0xff]
    %v248 = vld [vmem:[#allocation8 + $0xa8] sm:$0xff]
    %v249 = vld [vmem:[#allocation8 + $0xb0] sm:$0xff]
    %v250 = vld [vmem:[#allocation8 + $0xb8] sm:$0xff]
    %v251 = vld [vmem:[#allocation8 + $0xc0] sm:$0xff]
    %v252 = vld [vmem:[#allocation8 + $0xc8] sm:$0xff]
    %v253 = vld [vmem:[#allocation8 + $0xd0] sm:$0xff]
    %v254 = vld [vmem:[#allocation8 + $0xd8] sm:$0xff]
    %v255 = vld [vmem:[#allocation8 + $0xe0] sm:$0xff]
    %v256 = vld [vmem:[#allocation8 + $0xe8] sm:$0xff]
    %v257 = vld [vmem:[#allocation8 + $0xf0] sm:$0xff]
    %v258 = vld [vmem:[#allocation8 + $0xf8] sm:$0xff]
    %v259 = vld [vmem:[%s6] sm:$0x3]
    %v261 = vlaneseq
    %v262 = vshrl.u32 %v261, 7
    %v263 = vsub.s32 0, %v262
    %v264 = vrot.slane %v259, %v263
    %v265 = vlaneseq
    %v266 = vshrl.u32 %v265, 7
    %v267 = vsub.s32 1, %v266
    %v268 = vrot.slane %v259, %v267
    %271 = vmatprep.subr.mxu0 %v228
    %272 = vmatpush1.msra.mxu0 %v227
    %273 = vmatprep.subr.mxu0 %v230
    %274 = vmatpush1.msra.mxu0 %v229
    %275 = vmatprep.subr.mxu0 %v232
    %276 = vmatpush1.msra.mxu0 %v231
    %277 = vmatprep.subr.mxu0 %v234
    %278 = vmatpush1.msra.mxu0 %v233
    %279 = vmatprep.subr.mxu0 %v236
    %280 = vmatpush1.msra.mxu0 %v235
    %281 = vmatprep.subr.mxu0 %v238
    %282 = vmatpush1.msra.mxu0 %v237
    %283 = vmatprep.subr.mxu0 %v240
    %284 = vmatpush1.msra.mxu0 %v239
    %285 = vmatprep.subr.mxu0 %v242
    %286 = vmatpush1.msra.mxu0 %v241
    %287 = vmatprep.subr.mxu0 %v244
    %288 = vmatpush1.msra.mxu0 %v243
    %289 = vmatprep.subr.mxu0 %v246
    %290 = vmatpush1.msra.mxu0 %v245
    %291 = vmatprep.subr.mxu0 %v248
    %292 = vmatpush1.msra.mxu0 %v247
    %293 = vmatprep.subr.mxu0 %v250
    %294 = vmatpush1.msra.mxu0 %v249
    %295 = vmatprep.subr.mxu0 %v252
    %296 = vmatpush1.msra.mxu0 %v251
    %297 = vmatprep.subr.mxu0 %v254
    %298 = vmatpush1.msra.mxu0 %v253
    %299 = vmatprep.subr.mxu0 %v256
    %300 = vmatpush1.msra.mxu0 %v255
    %301 = vmatprep.subr.mxu0 %v258
    %302 = vmatpush1.msra.mxu0 %v257
    %303 = vmatprep.subr.mxu0 0.0
    %304 = vmatpush1.msra.mxu0 0.0
    %305 = vmatprep.subr.mxu0 0.0
    %306 = vmatpush1.msra.mxu0 0.0
    %307 = vmatprep.subr.mxu0 0.0
    %308 = vmatpush1.msra.mxu0 0.0
    %309 = vmatprep.subr.mxu0 0.0
    %310 = vmatpush1.msra.mxu0 0.0
    %311 = vmatprep.subr.mxu0 0.0
    %312 = vmatpush1.msra.mxu0 0.0
    %313 = vmatprep.subr.mxu0 0.0
    %314 = vmatpush1.msra.mxu0 0.0
    %315 = vmatprep.subr.mxu0 0.0
    %316 = vmatpush1.msra.mxu0 0.0
    %317 = vmatprep.subr.mxu0 0.0
    %318 = vmatpush1.msra.mxu0 0.0
    %319 = vmatprep.subr.mxu0 0.0
    %320 = vmatpush1.msra.mxu0 0.0
    %321 = vmatprep.subr.mxu0 0.0
    %322 = vmatpush1.msra.mxu0 0.0
    %323 = vmatprep.subr.mxu0 0.0
    %324 = vmatpush1.msra.mxu0 0.0
    %325 = vmatprep.subr.mxu0 0.0
    %326 = vmatpush1.msra.mxu0 0.0
    %327 = vmatprep.subr.mxu0 0.0
    %328 = vmatpush1.msra.mxu0 0.0
    %329 = vmatprep.subr.mxu0 0.0
    %330 = vmatpush1.msra.mxu0 0.0
    %331 = vmatprep.subr.mxu0 0.0
    %332 = vmatpush1.msra.mxu0 0.0
    %333 = vmatprep.subr.mxu0 0.0
    %334 = vmatpush1.msra.mxu0 0.0
    %335 = vmatprep.mubr.f32.mxu0 0.0
    %336 = vmatmul.mubr.f32.gmra.mrb[0].mxu0 %v225
    %v337 = vpop.f32.mrb[0].mxu0
    %v338 = vadd.f32 %v264, %v337
    %v339 = vpop.f32.mrb[0].mxu0
    %v340 = vadd.f32 %v268, %v339
    %341 = vmatprep.mubr.f32.mxu0 0.0
    %342 = vmatmul.mubr.f32.gmra.mrb[0].mxu0 %v226
    %v343 = vpop.f32.mrb[0].mxu0
    %v344 = vadd.f32 %v264, %v343
    %v345 = vpop.f32.mrb[0].mxu0
    %v346 = vadd.f32 %v268, %v345
    %347 = vdwg.mxu0
    %348 = vst [vmem:[#allocation9] sm:$0xff] %v338
    %349 = vst [vmem:[#allocation9 + $0x8] sm:$0xff] %v340
    %350 = vst [vmem:[#allocation9 + $0x10] sm:$0xff] %v344
    %351 = vst [vmem:[#allocation9 + $0x18] sm:$0xff] %v346
    // Predicated region
    $region46: #{tpu_custom_call.1} parent=1 // pred_check
      _
    $region47: #{tpu_custom_call.1} parent=1 // pred_check_branch
      %353 = sbr.rel (0) target = $region49
    $region48: #{tpu_custom_call.1} parent=1 // pred_region
      %s355 = ssub.s32 512, 512
      %356 = vsyncadd [#allocation5], %s355
      %s357 = sshll.u32 [#allocation9], 4
      %s358 = int_to_ptr.vmem [resolvable:$true] %s357
      %363 = dma.vmem_to_hbm [thread:$0]  %s358, 512, %s7, [#allocation5], 256, 256, 16
    $region49: #{tpu_custom_call.1} parent=1 // pred_fallthru
      _
    // Predicated region
    $region50: #{tpu_custom_call.1} parent=1 // pred_check
      _
    $region51: #{tpu_custom_call.1} parent=1 // pred_check_branch
      %365 = sbr.rel (0) target = $region53
    $region52: #{tpu_custom_call.1} parent=1 // pred_region
      %366 = dma.done [#allocation5], 512
    $region53: #{tpu_custom_call.1} parent=1 // pred_fallthru
      _
    %367 = vsyncpa [#allocation4], 1
    %368 = vsyncpa [#allocation7], 1
    %369 = vsyncpa [#allocation5], 1

// kernel: tpu_custom_call.1
$region0: #{tpu_custom_call.1}
  #allocation0 [shape = 'u32[]', space=smem, size = 0x4, offset = 0x4, fixed_abs, tag = 'smem constant byte address 0x4 - core index']
  #allocation1 [shape = 'u32[144,128]{1,0:T(1,128)}', space=vmem, size = 0x12000, scoped, tag = 'internal scratch']
  #allocation2 [shape = 'f32[16,128]{1,0:T(8,128)}', space=vmem, size = 0x2000, scoped, tag = 'scratch operand']
  %s0 = inlined_call_operand.hbm [shape: f32[16,128], index: 0, kind: input, shape index: {}]
  %s1 = inlined_call_operand.hbm [shape: f32[128,128], index: 1, kind: input, shape index: {}]
  %s2 = inlined_call_operand.vmem [shape: f32[1,128], index: 2, kind: input, shape index: {}]
  %s3 = inlined_call_operand.vmem [shape: f32[1,128], index: 3, kind: input, shape index: {}]
  %s4 = inlined_call_operand.vmem [shape: f32[1,128], index: 4, kind: input, shape index: {}]
  %s5 = inlined_call_operand.hbm [shape: f32[128,256], index: 5, kind: input, shape index: {}]
  %s6 = inlined_call_operand.vmem [shape: f32[1,256], index: 6, kind: input, shape index: {}]
  %s7 = inlined_call_operand.hbm [shape: f32[16,256], index: 7, kind: output, shape index: {}]
  %s8 = sld [smem:[#allocation0]]
  $region54: #{tpu_custom_call.1} parent=0
    _
  %s10 = ssub.s32 1, %s8
  %s11 = scalar_select 0, %s10, %s8
  $region1: #{tpu_custom_call.1} parent=0
    #allocation3 [shape = 'u8[8192]{0}', space=vmem, size = 0x2000, scoped, tag = 'input window, operand 0, single buffered']
    #allocation4 [shape = 's32[1]{0}', space=sflag, size = 0x4, scoped, tag = 'scoped memory for tpu_custom_call.1']
    #allocation5 [shape = 's32[1]{0}', space=sflag, size = 0x4, scoped, tag = 'scoped memory for tpu_custom_call.1']
    #allocation6 [shape = 'u8[65536]{0}', space=vmem, size = 0x10000, scoped, tag = 'input window, operand 1, single buffered']
    #allocation7 [shape = 's32[1]{0}', space=sflag, size = 0x4, scoped, tag = 'scoped memory for tpu_custom_call.1']
    #allocation8 [shape = 'u8[131072]{0}', space=vmem, size = 0x20000, scoped, tag = 'input window, operand 5, single buffered']
    #allocation9 [shape = 'u8[16384]{0}', space=vmem, size = 0x4000, scoped, tag = 'output window, operand 0, single buffered']
    %12 = vsyncpa [#allocation4], 0
    %13 = vsyncpa [#allocation7], 0
    %14 = vsyncpa [#allocation5], 0
    // Predicated region
    $region2: #{tpu_custom_call.1} parent=1 // pred_check
      _
    $region3: #{tpu_custom_call.1} parent=1 // pred_check_branch
      %16 = sbr.rel (0) target = $region5
    $region4: #{tpu_custom_call.1} parent=1 // pred_region
      %s18 = ssub.s32 256, 256
      %19 = vsyncadd [#allocation4], %s18
      %s20 = sshll.u32 [#allocation3], 4
      %s21 = int_to_ptr.vmem [resolvable:$true] %s20
      %26 = dma.hbm_to_vmem [thread:$0]  %s0, 256, %s21, [#allocation4], 128, 128, 8
    $region5: #{tpu_custom_call.1} parent=1 // pred_fallthru
      _
    // Predicated region
    $region6: #{tpu_custom_call.1} parent=1 // pred_check
      _
    $region7: #{tpu_custom_call.1} parent=1 // pred_check_branch
      %28 = sbr.rel (0) target = $region9
    $region8: #{tpu_custom_call.1} parent=1 // pred_region
      %s30 = ssub.s32 2048, 2048
      %31 = vsyncadd [#allocation7], %s30
      %s32 = sshll.u32 [#allocation6], 4
      %s33 = int_to_ptr.vmem [resolvable:$true] %s32
      %38 = dma.hbm_to_vmem [thread:$0]  %s1, 2048, %s33, [#allocation7], 128, 128, 8
    $region9: #{tpu_custom_call.1} parent=1 // pred_fallthru
      _
    // Predicated region
    $region10: #{tpu_custom_call.1} parent=1 // pred_check
      _
    $region11: #{tpu_custom_call.1} parent=1 // pred_check_branch
      %40 = sbr.rel (0) target = $region13
    $region12: #{tpu_custom_call.1} parent=1 // pred_region
      _
    $region13: #{tpu_custom_call.1} parent=1 // pred_fallthru
      _
    // Predicated region
    $region14: #{tpu_custom_call.1} parent=1 // pred_check
      _
    $region15: #{tpu_custom_call.1} parent=1 // pred_check_branch
      %42 = sbr.rel (0) target = $region17
    $region16: #{tpu_custom_call.1} parent=1 // pred_region
      _
    $region17: #{tpu_custom_call.1} parent=1 // pred_fallthru
      _
    // Predicated region
    $region18: #{tpu_custom_call.1} parent=1 // pred_check
      _
    $region19: #{tpu_custom_call.1} parent=1 // pred_check_branch
      %44 = sbr.rel (0) target = $region21
    $region20: #{tpu_custom_call.1} parent=1 // pred_region
      _
    $region21: #{tpu_custom_call.1} parent=1 // pred_fallthru
      _
    // Predicated region
    $region22: #{tpu_custom_call.1} parent=1 // pred_check
      _
    $region23: #{tpu_custom_call.1} parent=1 // pred_check_branch
      %46 = sbr.rel (0) target = $region25
    $region24: #{tpu_custom_call.1} parent=1 // pred_region
      %s48 = ssub.s32 4096, 4096
      %49 = vsyncadd [#allocation7], %s48
      %s50 = sshll.u32 [#allocation8], 4
      %s51 = int_to_ptr.vmem [resolvable:$true] %s50
      %56 = dma.hbm_to_vmem [thread:$0]  %s5, 4096, %s51, [#allocation7], 256, 256, 16
    $region25: #{tpu_custom_call.1} parent=1 // pred_fallthru
      _
    // Predicated region
    $region26: #{tpu_custom_call.1} parent=1 // pred_check
      _
    $region27: #{tpu_custom_call.1} parent=1 // pred_check_branch
      %58 = sbr.rel (0) target = $region29
    $region28: #{tpu_custom_call.1} parent=1 // pred_region
      _
    $region29: #{tpu_custom_call.1} parent=1 // pred_fallthru
      _
    // Predicated region
    $region30: #{tpu_custom_call.1} parent=1 // pred_check
      _
    $region31: #{tpu_custom_call.1} parent=1 // pred_check_branch
      %60 = sbr.rel (0) target = $region33
    $region32: #{tpu_custom_call.1} parent=1 // pred_region
      %61 = dma.done [#allocation4], 256
    $region33: #{tpu_custom_call.1} parent=1 // pred_fallthru
      _
    // Predicated region
    $region34: #{tpu_custom_call.1} parent=1 // pred_check
      _
    $region35: #{tpu_custom_call.1} parent=1 // pred_check_branch
      %63 = sbr.rel (0) target = $region37
    $region36: #{tpu_custom_call.1} parent=1 // pred_region
      %64 = dma.done [#allocation7], 2048
    $region37: #{tpu_custom_call.1} parent=1 // pred_fallthru
      _
    // Predicated region
    $region38: #{tpu_custom_call.1} parent=1 // pred_check
      _
    $region39: #{tpu_custom_call.1} parent=1 // pred_check_branch
      %66 = sbr.rel (0) target = $region41
    $region40: #{tpu_custom_call.1} parent=1 // pred_region
      %67 = dma.done [#allocation7], 4096
    $region41: #{tpu_custom_call.1} parent=1 // pred_fallthru
      _
    %p68 = scmp.eq.s32.totalorder 0, 0
    // Predicated region
    $region42: #{tpu_custom_call.1} parent=1 // pred_check
      %p69 = pneg %p68
    $region43: #{tpu_custom_call.1} parent=1 // pred_check_branch
      %71 = sbr.rel (%p69) target = $region45
    $region44: #{tpu_custom_call.1} parent=1 // pred_region
      %v72 = vld [vmem:[#allocation3] sm:$0xff]
      %v73 = vld [vmem:[#allocation3 + $0x8] sm:$0xff]
      %v74 = vld [vmem:[#allocation6] sm:$0xff]
      %v75 = vld [vmem:[#allocation6 + $0x8] sm:$0xff]
      %v76 = vld [vmem:[#allocation6 + $0x10] sm:$0xff]
      %v77 = vld [vmem:[#allocation6 + $0x18] sm:$0xff]
      %v78 = vld [vmem:[#allocation6 + $0x20] sm:$0xff]
      %v79 = vld [vmem:[#allocation6 + $0x28] sm:$0xff]
      %v80 = vld [vmem:[#allocation6 + $0x30] sm:$0xff]
      %v81 = vld [vmem:[#allocation6 + $0x38] sm:$0xff]
      %v82 = vld [vmem:[#allocation6 + $0x40] sm:$0xff]
      %v83 = vld [vmem:[#allocation6 + $0x48] sm:$0xff]
      %v84 = vld [vmem:[#allocation6 + $0x50] sm:$0xff]
      %v85 = vld [vmem:[#allocation6 + $0x58] sm:$0xff]
      %v86 = vld [vmem:[#allocation6 + $0x60] sm:$0xff]
      %v87 = vld [vmem:[#allocation6 + $0x68] sm:$0xff]
      %v88 = vld [vmem:[#allocation6 + $0x70] sm:$0xff]
      %v89 = vld [vmem:[#allocation6 + $0x78] sm:$0xff]
      %v90 = vld [vmem:[%s2] sm:$0x1]
      %v92 = vlaneseq
      %v93 = vshrl.u32 %v92, 7
      %v94 = vsub.s32 0, %v93
      %v95 = vrot.slane %v90, %v94
      %97 = vmatprep.subr.mxu0 0.0
      %98 = vmatpush1.msra.mxu0 %v74
      %99 = vmatprep.subr.mxu0 0.0
      %100 = vmatpush1.msra.mxu0 %v75
      %101 = vmatprep.subr.mxu0 0.0
      %102 = vmatpush1.msra.mxu0 %v76
      %103 = vmatprep.subr.mxu0 0.0
      %104 = vmatpush1.msra.mxu0 %v77
      %105 = vmatprep.subr.mxu0 0.0
      %106 = vmatpush1.msra.mxu0 %v78
      %107 = vmatprep.subr.mxu0 0.0
      %108 = vmatpush1.msra.mxu0 %v79
      %109 = vmatprep.subr.mxu0 0.0
      %110 = vmatpush1.msra.mxu0 %v80
      %111 = vmatprep.subr.mxu0 0.0
      %112 = vmatpush1.msra.mxu0 %v81
      %113 = vmatprep.subr.mxu0 0.0
      %114 = vmatpush1.msra.mxu0 %v82
      %115 = vmatprep.subr.mxu0 0.0
      %116 = vmatpush1.msra.mxu0 %v83
      %117 = vmatprep.subr.mxu0 0.0
      %118 = vmatpush1.msra.mxu0 %v84
      %119 = vmatprep.subr.mxu0 0.0
      %120 = vmatpush1.msra.mxu0 %v85
      %121 = vmatprep.subr.mxu0 0.0
      %122 = vmatpush1.msra.mxu0 %v86
      %123 = vmatprep.subr.mxu0 0.0
      %124 = vmatpush1.msra.mxu0 %v87
      %125 = vmatprep.subr.mxu0 0.0
      %126 = vmatpush1.msra.mxu0 %v88
      %127 = vmatprep.subr.mxu0 0.0
      %128 = vmatpush1.msra.mxu0 %v89
      %129 = vmatprep.subr.mxu0 0.0
      %130 = vmatpush1.msra.mxu0 0.0
      %131 = vmatprep.subr.mxu0 0.0
      %132 = vmatpush1.msra.mxu0 0.0
      %133 = vmatprep.subr.mxu0 0.0
      %134 = vmatpush1.msra.mxu0 0.0
      %135 = vmatprep.subr.mxu0 0.0
      %136 = vmatpush1.msra.mxu0 0.0
      %137 = vmatprep.subr.mxu0 0.0
      %138 = vmatpush1.msra.mxu0 0.0
      %139 = vmatprep.subr.mxu0 0.0
      %140 = vmatpush1.msra.mxu0 0.0
      %141 = vmatprep.subr.mxu0 0.0
      %142 = vmatpush1.msra.mxu0 0.0
      %143 = vmatprep.subr.mxu0 0.0
      %144 = vmatpush1.msra.mxu0 0.0
      %145 = vmatprep.subr.mxu0 0.0
      %146 = vmatpush1.msra.mxu0 0.0
      %147 = vmatprep.subr.mxu0 0.0
      %148 = vmatpush1.msra.mxu0 0.0
      %149 = vmatprep.subr.mxu0 0.0
      %150 = vmatpush1.msra.mxu0 0.0
      %151 = vmatprep.subr.mxu0 0.0
      %152 = vmatpush1.msra.mxu0 0.0
      %153 = vmatprep.subr.mxu0 0.0
      %154 = vmatpush1.msra.mxu0 0.0
      %155 = vmatprep.subr.mxu0 0.0
      %156 = vmatpush1.msra.mxu0 0.0
      %157 = vmatprep.subr.mxu0 0.0
      %158 = vmatpush1.msra.mxu0 0.0
      %159 = vmatprep.subr.mxu0 0.0
      %160 = vmatpush1.msra.mxu0 0.0
      %161 = vmatprep.mubr.f32.mxu0 0.0
      %162 = vmatmul.mubr.f32.gmra.mrb[0].mxu0 %v72
      %v163 = vpop.f32.mrb[0].mxu0
      %v164 = vadd.f32 %v95, %v163
      %v165 = vpop.f32.mrb[0].mxu0
      %166 = vmatprep.mubr.f32.mxu0 0.0
      %167 = vmatmul.mubr.f32.gmra.mrb[0].mxu0 %v73
      %v168 = vpop.f32.mrb[0].mxu0
      %v169 = vadd.f32 %v95, %v168
      %v170 = vpop.f32.mrb[0].mxu0
      %171 = vdwg.mxu0
      %v172 = vmul.f32 %v164, 0.5
      %v173 = vmul.f32 %v169, 0.5
      %v174 = vmul.f32 %v164, 0.70710677
      %v175 = vmul.f32 %v169, 0.70710677
      %v176 = verf.f32.pop %v174
      %v177 = verf.f32.pop %v175
      %v178 = vadd.f32 %v176, 1.0
      %v179 = vadd.f32 %v177, 1.0
      %v180 = vmul.f32 %v172, %v178
      %v181 = vmul.f32 %v173, %v179
      %182 = vadd.xlane.f32.xlu0 %v180
      %v183 = vpop.xlane.xlu0 %182
      %184 = vadd.xlane.f32.xlu0 %v181
      %v185 = vpop.xlane.xlu0 %184
      %v186 = vrcp.pop 128.0
      %v187 = vmul.f32 %v183, %v186
      %v188 = vmul.f32 %v185, %v186
      %v189 = vsub.f32 %v180, %v187
      %v190 = vsub.f32 %v181, %v188
      %v191 = vmul.f32 %v189, %v189
      %v192 = vmul.f32 %v190, %v190
      %193 = vadd.xlane.f32.xlu0 %v191
      %v194 = vpop.xlane.xlu0 %193
      %195 = vadd.xlane.f32.xlu0 %v192
      %v196 = vpop.xlane.xlu0 %195
      %v197 = vmul.f32 %v194, %v186
      %v198 = vmul.f32 %v196, %v186
      %v199 = vadd.f32 %v197, 1e-12
      %v200 = vadd.f32 %v198, 1e-12
      %v201 = vrsqrt.pop %v199
      %v202 = vrsqrt.pop %v200
      %v203 = vmul.f32 %v189, %v201
      %v204 = vmul.f32 %v190, %v202
      %v205 = vld [vmem:[%s3] sm:$0x1]
      %v207 = vlaneseq
      %v208 = vshrl.u32 %v207, 7
      %v209 = vsub.s32 0, %v208
      %v210 = vrot.slane %v205, %v209
      %v212 = vmul.f32 %v203, %v210
      %v213 = vmul.f32 %v204, %v210
      %v214 = vld [vmem:[%s4] sm:$0x1]
      %v216 = vlaneseq
      %v217 = vshrl.u32 %v216, 7
      %v218 = vsub.s32 0, %v217
      %v219 = vrot.slane %v214, %v218
      %v221 = vadd.f32 %v212, %v219
      %v222 = vadd.f32 %v213, %v219
      %223 = vst [vmem:[#allocation2] sm:$0xff] %v221
      %224 = vst [vmem:[#allocation2 + $0x8] sm:$0xff] %v222
    $region45: #{tpu_custom_call.1} parent=1 // pred_fallthru
      _
    %v225 = vld [vmem:[#allocation2] sm:$0xff]
    %v226 = vld [vmem:[#allocation2 + $0x8] sm:$0xff]
    %v227 = vld [vmem:[#allocation8] sm:$0xff]
    %v228 = vld [vmem:[#allocation8 + $0x8] sm:$0xff]
    %v229 = vld [vmem:[#allocation8 + $0x10] sm:$0xff]
    %v230 = vld [vmem:[#allocation8 + $0x18] sm:$0xff]
    %v231 = vld [vmem:[#allocation8 + $0x20] sm:$0xff]
    %v232 = vld [vmem:[#allocation8 + $0x28] sm:$0xff]
    %v233 = vld [vmem:[#allocation8 + $0x30] sm:$0xff]
    %v234 = vld [vmem:[#allocation8 + $0x38] sm:$0xff]
    %v235 = vld [vmem:[#allocation8 + $0x40] sm:$0xff]
    %v236 = vld [vmem:[#allocation8 + $0x48] sm:$0xff]
    %v237 = vld [vmem:[#allocation8 + $0x50] sm:$0xff]
    %v238 = vld [vmem:[#allocation8 + $0x58] sm:$0xff]
    %v239 = vld [vmem:[#allocation8 + $0x60] sm:$0xff]
    %v240 = vld [vmem:[#allocation8 + $0x68] sm:$0xff]
    %v241 = vld [vmem:[#allocation8 + $0x70] sm:$0xff]
    %v242 = vld [vmem:[#allocation8 + $0x78] sm:$0xff]
    %v243 = vld [vmem:[#allocation8 + $0x80] sm:$0xff]
    %v244 = vld [vmem:[#allocation8 + $0x88] sm:$0xff]
    %v245 = vld [vmem:[#allocation8 + $0x90] sm:$0xff]
    %v246 = vld [vmem:[#allocation8 + $0x98] sm:$0xff]
    %v247 = vld [vmem:[#allocation8 + $0xa0] sm:$0xff]
    %v248 = vld [vmem:[#allocation8 + $0xa8] sm:$0xff]
    %v249 = vld [vmem:[#allocation8 + $0xb0] sm:$0xff]
    %v250 = vld [vmem:[#allocation8 + $0xb8] sm:$0xff]
    %v251 = vld [vmem:[#allocation8 + $0xc0] sm:$0xff]
    %v252 = vld [vmem:[#allocation8 + $0xc8] sm:$0xff]
    %v253 = vld [vmem:[#allocation8 + $0xd0] sm:$0xff]
    %v254 = vld [vmem:[#allocation8 + $0xd8] sm:$0xff]
    %v255 = vld [vmem:[#allocation8 + $0xe0] sm:$0xff]
    %v256 = vld [vmem:[#allocation8 + $0xe8] sm:$0xff]
    %v257 = vld [vmem:[#allocation8 + $0xf0] sm:$0xff]
    %v258 = vld [vmem:[#allocation8 + $0xf8] sm:$0xff]
    %v259 = vld [vmem:[%s6] sm:$0x3]
    %v261 = vlaneseq
    %v262 = vshrl.u32 %v261, 7
    %v263 = vsub.s32 0, %v262
    %v264 = vrot.slane %v259, %v263
    %v265 = vlaneseq
    %v266 = vshrl.u32 %v265, 7
    %v267 = vsub.s32 1, %v266
    %v268 = vrot.slane %v259, %v267
    %271 = vmatprep.subr.mxu0 %v228
    %272 = vmatpush1.msra.mxu0 %v227
    %273 = vmatprep.subr.mxu0 %v230
    %274 = vmatpush1.msra.mxu0 %v229
    %275 = vmatprep.subr.mxu0 %v232
    %276 = vmatpush1.msra.mxu0 %v231
    %277 = vmatprep.subr.mxu0 %v234
    %278 = vmatpush1.msra.mxu0 %v233
    %279 = vmatprep.subr.mxu0 %v236
    %280 = vmatpush1.msra.mxu0 %v235
    %281 = vmatprep.subr.mxu0 %v238
    %282 = vmatpush1.msra.mxu0 %v237
    %283 = vmatprep.subr.mxu0 %v240
    %284 = vmatpush1.msra.mxu0 %v239
    %285 = vmatprep.subr.mxu0 %v242
    %286 = vmatpush1.msra.mxu0 %v241
    %287 = vmatprep.subr.mxu0 %v244
    %288 = vmatpush1.msra.mxu0 %v243
    %289 = vmatprep.subr.mxu0 %v246
    %290 = vmatpush1.msra.mxu0 %v245
    %291 = vmatprep.subr.mxu0 %v248
    %292 = vmatpush1.msra.mxu0 %v247
    %293 = vmatprep.subr.mxu0 %v250
    %294 = vmatpush1.msra.mxu0 %v249
    %295 = vmatprep.subr.mxu0 %v252
    %296 = vmatpush1.msra.mxu0 %v251
    %297 = vmatprep.subr.mxu0 %v254
    %298 = vmatpush1.msra.mxu0 %v253
    %299 = vmatprep.subr.mxu0 %v256
    %300 = vmatpush1.msra.mxu0 %v255
    %301 = vmatprep.subr.mxu0 %v258
    %302 = vmatpush1.msra.mxu0 %v257
    %303 = vmatprep.subr.mxu0 0.0
    %304 = vmatpush1.msra.mxu0 0.0
    %305 = vmatprep.subr.mxu0 0.0
    %306 = vmatpush1.msra.mxu0 0.0
    %307 = vmatprep.subr.mxu0 0.0
    %308 = vmatpush1.msra.mxu0 0.0
    %309 = vmatprep.subr.mxu0 0.0
    %310 = vmatpush1.msra.mxu0 0.0
    %311 = vmatprep.subr.mxu0 0.0
    %312 = vmatpush1.msra.mxu0 0.0
    %313 = vmatprep.subr.mxu0 0.0
    %314 = vmatpush1.msra.mxu0 0.0
    %315 = vmatprep.subr.mxu0 0.0
    %316 = vmatpush1.msra.mxu0 0.0
    %317 = vmatprep.subr.mxu0 0.0
    %318 = vmatpush1.msra.mxu0 0.0
    %319 = vmatprep.subr.mxu0 0.0
    %320 = vmatpush1.msra.mxu0 0.0
    %321 = vmatprep.subr.mxu0 0.0
    %322 = vmatpush1.msra.mxu0 0.0
    %323 = vmatprep.subr.mxu0 0.0
    %324 = vmatpush1.msra.mxu0 0.0
    %325 = vmatprep.subr.mxu0 0.0
    %326 = vmatpush1.msra.mxu0 0.0
    %327 = vmatprep.subr.mxu0 0.0
    %328 = vmatpush1.msra.mxu0 0.0
    %329 = vmatprep.subr.mxu0 0.0
    %330 = vmatpush1.msra.mxu0 0.0
    %331 = vmatprep.subr.mxu0 0.0
    %332 = vmatpush1.msra.mxu0 0.0
    %333 = vmatprep.subr.mxu0 0.0
    %334 = vmatpush1.msra.mxu0 0.0
    %335 = vmatprep.mubr.f32.mxu0 0.0
    %336 = vmatmul.mubr.f32.gmra.mrb[0].mxu0 %v225
    %v337 = vpop.f32.mrb[0].mxu0
    %v338 = vadd.f32 %v264, %v337
    %v339 = vpop.f32.mrb[0].mxu0
    %v340 = vadd.f32 %v268, %v339
    %341 = vmatprep.mubr.f32.mxu0 0.0
    %342 = vmatmul.mubr.f32.gmra.mrb[0].mxu0 %v226
    %v343 = vpop.f32.mrb[0].mxu0
    %v344 = vadd.f32 %v264, %v343
    %v345 = vpop.f32.mrb[0].mxu0
    %v346 = vadd.f32 %v268, %v345
    %347 = vdwg.mxu0
    %348 = vst [vmem:[#allocation9] sm:$0xff] %v338
    %349 = vst [vmem:[#allocation9 + $0x8] sm:$0xff] %v340
    %350 = vst [vmem:[#allocation9 + $0x10] sm:$0xff] %v344
    %351 = vst [vmem:[#allocation9 + $0x18] sm:$0xff] %v346
    // Predicated region
    $region46: #{tpu_custom_call.1} parent=1 // pred_check
      _
    $region47: #{tpu_custom_call.1} parent=1 // pred_check_branch
      %353 = sbr.rel (0) target = $region49
    $region48: #{tpu_custom_call.1} parent=1 // pred_region
      %s355 = ssub.s32 512, 512
      %356 = vsyncadd [#allocation5], %s355
      %s357 = sshll.u32 [#allocation9], 4
      %s358 = int_to_ptr.vmem [resolvable:$true] %s357
      %363 = dma.vmem_to_hbm [thread:$0]  %s358, 512, %s7, [#allocation5], 256, 256, 16
    $region49: #{tpu_custom_call.1} parent=1 // pred_fallthru
      _
    // Predicated region
    $region50: #{tpu_custom_call.1} parent=1 // pred_check
      _
    $region51: #{tpu_custom_call.1} parent=1 // pred_check_branch
      %365 = sbr.rel (0) target = $region53
    $region52: #{tpu_custom_call.1} parent=1 // pred_region
      %366 = dma.done [#allocation5], 512
    $region53: #{tpu_custom_call.1} parent=1 // pred_fallthru
      _
    %367 = vsyncpa [#allocation4], 1
    %368 = vsyncpa [#allocation7], 1
    %369 = vsyncpa [#allocation5], 1

</llo_original>
